<compile_context>
chip_gen: v6e
topology: v6e:2x2x1
jax: 0.10.0
libtpu: 0.0.40
codegen_flags: <defaults>
</compile_context>

<pallas_src>
import functools
import math

import jax
import jax.numpy as jnp
from jax.experimental import pallas as pl
from jax.experimental.pallas import tpu as pltpu


def _gelu_erf(x):
    # exact-erf GELU, matching the PyTorch module's gelu()
    return x * 0.5 * (1.0 + jax.lax.erf(x / math.sqrt(2.0)))


def ffn_kernel(x_ref, w1_ref, b1_ref, w2_ref, b2_ref, o_ref, acc_ref, *, precision):
    k = pl.program_id(1)  # inner-dimension (I) reduction step

    @pl.when(k == 0)
    def _init():
        acc_ref[...] = jnp.zeros_like(acc_ref)

    # First matmul on an I-chunk: (tm, H) @ (H, ti) -> (tm, ti), f32 accumulation on MXU.
    h = jnp.dot(x_ref[...], w1_ref[...],
                preferred_element_type=jnp.float32, precision=precision)
    h = _gelu_erf(h + b1_ref[...].astype(jnp.float32))

    # Second matmul accumulates into the resident f32 output tile: (tm, ti) @ (ti, H).
    acc_ref[...] += jnp.dot(h.astype(w2_ref.dtype), w2_ref[...],
                            preferred_element_type=jnp.float32, precision=precision)

    @pl.when(k == pl.num_programs(1) - 1)
    def _finalize():
        # b2 added once per output tile; dropout is identity in eval mode.
        # TODO(synk): training-mode dropout would use pltpu.prng_seed/prng_random_bits here.
        o_ref[...] = (acc_ref[...] + b2_ref[...].astype(jnp.float32)).astype(o_ref.dtype)


def _round_up(x, m):
    return ((x + m - 1) // m) * m


def _cdiv(a, b):
    return -(-a // b)


def _hw_config():
    """Generation-aware VMEM budget and tile targets.

    v5e / v6e have 128 MiB physical VMEM per TensorCore; v7x has 64 MiB.
    (v5e vs v6e are not distinguishable from VMEM alone; 640-row M tiles are
    within budget on both and the balanced-tile selection removes padding waste.)
    """
    phys = 64 * 2**20  # conservative fallback = v7x-class
    try:
        info = pltpu.get_tpu_info()
        phys = int(getattr(info, "vmem_capacity_bytes", phys))
    except Exception:
        pass
    if phys >= 120 * 2**20:   # v5e / v6e
        return {"budget": 100 * 2**20, "tm_target": 640, "ti_target": 512}
    # v7x-class: leave headroom below the 64 MiB physical VMEM.
    return {"budget": 52 * 2**20, "tm_target": 448, "ti_target": 256}


def _footprint_bytes(tm, ti, H, wb, ob, weight_bufs=2, xo_bufs=2):
    """Estimated VMEM footprint for one grid step (double-buffered by default)."""
    x_bytes = xo_bufs * tm * H * wb                       # x row tiles
    out_bytes = xo_bufs * tm * H * ob                     # output tiles
    w_bytes = weight_bufs * 2 * H * ti * wb               # W1 column + W2 row slabs
    b_bytes = weight_bufs * 8 * max(ti, 128) * 4 + 2 * 8 * max(H, 128) * 4  # biases (layout-padded)
    acc_bytes = tm * H * 4                                # f32 accumulator scratch
    tmp_bytes = tm * ti * (4 + wb)                        # f32 GELU intermediate + cast copy
    return x_bytes + out_bytes + w_bytes + b_bytes + acc_bytes + tmp_bytes


def prepare_ffn_params(w1, b1, w2, b2, *, compute_dtype=jnp.bfloat16):
    """Hoist the weight cast/pad out of the per-step hot path (call once, reuse).

    w1: [H, I]; b1: [I]; w2: [I, H]; b2: [H].
    """
    compute_dtype = jnp.dtype(compute_dtype)
    H, I = w1.shape
    cfg = _hw_config()
    budget = int(cfg["budget"] * 0.85)  # headroom for compiler-internal scratch
    wb = compute_dtype.itemsize

    # Full-I weight residency when the whole W1+W2 (plus x/out/acc working set at
    # the target M tile) fits in VMEM: weight block indices become constant, so
    # the weights are DMA'd exactly once for the entire kernel.
    if I <= cfg["ti_target"] or _footprint_bytes(cfg["tm_target"], I, H, wb, 4) <= budget:
        ti, I_pad = I, I
    else:
        ti = cfg["ti_target"]            # multiple of 128
        I_pad = _round_up(I, ti)

    w1c = w1.astype(compute_dtype)
    w2c = w2.astype(compute_dtype)
    b1f = b1.astype(jnp.float32)
    if I_pad != I:
        # Zero-padded W1 columns / W2 rows contribute exactly 0 (gelu(0)=0).
        w1c = jnp.pad(w1c, ((0, 0), (0, I_pad - I)))
        w2c = jnp.pad(w2c, ((0, I_pad - I), (0, 0)))
        b1f = jnp.pad(b1f, (0, I_pad - I))
    b1f = b1f.reshape(1, I_pad)
    b2f = b2.astype(jnp.float32).reshape(1, H)

    return {"w1": w1c, "b1": b1f, "w2": w2c, "b2": b2f,
            "H": H, "I": I, "I_pad": I_pad, "ti": ti,
            "compute_dtype": compute_dtype}


def feed_forward_prepared(x, params, *, precision=None):
    """x: [B, S, H]; params from prepare_ffn_params()."""
    B, S, H = x.shape
    assert H == params["H"], "hidden size mismatch"
    compute_dtype = params["compute_dtype"]
    ti, I_pad = params["ti"], params["I_pad"]
    out_dtype = jnp.dtype(x.dtype)
    cfg = _hw_config()
    budget = int(cfg["budget"] * 0.85)
    wb, ob = compute_dtype.itemsize, out_dtype.itemsize

    M = B * S
    # Sublane multiple: 8 for 4-byte, 16 for 2-byte operands.
    sub = 16 if compute_dtype.itemsize <= 2 else 8

    # M tile: as large as the roofline wants (arithmetic intensity vs weight
    # re-streaming), shrunk only if VMEM-tight, then balanced over the actual M
    # so padding waste is minimal; >= 2 tiles keeps both v7x cores busy.
    tm_cap = max(sub, (cfg["tm_target"] // sub) * sub)
    while tm_cap > sub and _footprint_bytes(tm_cap, ti, H, wb, ob) > budget:
        tm_cap = max(sub, ((tm_cap // 2) // sub) * sub)
    n_tiles = _cdiv(M, tm_cap)
    if n_tiles == 1 and M >= 2 * sub:
        n_tiles = 2
    tm = _round_up(_cdiv(M, n_tiles), sub)
    M_pad = _round_up(M, tm)

    footprint = _footprint_bytes(tm, ti, H, wb, ob)
    tight = footprint > (3 * budget) // 4
    vmem_limit = int(min(cfg["budget"], max(32 * 2**20, int(footprint * 1.4))))

    x2 = x.reshape(M, H).astype(compute_dtype)
    if M_pad != M:
        x2 = jnp.pad(x2, ((0, M_pad - M), (0, 0)))

    grid = (M_pad // tm, I_pad // ti)
    n_m = grid[0]

    # When VMEM is tight (v7x-class large shapes), single-buffer the blocks whose
    # index is constant across the inner k axis; their second buffer only helps
    # across i boundaries, so the overlap loss is negligible.
    if tight:
        x_spec = pl.BlockSpec((tm, H), lambda i, k: (i, 0), pipeline_mode=pl.Buffered(1))
        b2_spec = pl.BlockSpec((1, H), lambda i, k: (0, 0), pipeline_mode=pl.Buffered(1))
    else:
        x_spec = pl.BlockSpec((tm, H), lambda i, k: (i, 0))
        b2_spec = pl.BlockSpec((1, H), lambda i, k: (0, 0))
    # TODO(synk): Buffered(1) on out_specs would reclaim another tm*H*ob bytes on v7x.

    weight_bytes = 2 * H * I_pad * wb
    cost = pl.CostEstimate(
        flops=4 * M_pad * H * I_pad,           # two M x H x I matmuls
        transcendentals=M_pad * I_pad,         # one erf per intermediate element
        bytes_accessed=(M_pad * H * (wb + ob)
                        + weight_bytes * (1 if ti == I_pad else n_m)
                        + I_pad * 4 + H * 4),
    )

    kernel = functools.partial(ffn_kernel, precision=precision)

    out = pl.pallas_call(
        kernel,
        out_shape=jax.ShapeDtypeStruct((M_pad, H), out_dtype),
        grid_spec=pltpu.PrefetchScalarGridSpec(
            num_scalar_prefetch=0,
            grid=grid,
            in_specs=[
                x_spec,                                        # x row tile
                pl.BlockSpec((H, ti), lambda i, k: (0, k)),    # W1 column slab
                pl.BlockSpec((1, ti), lambda i, k: (0, k)),    # b1 chunk
                pl.BlockSpec((ti, H), lambda i, k: (k, 0)),    # W2 row slab
                b2_spec,                                       # b2
            ],
            out_specs=pl.BlockSpec((tm, H), lambda i, k: (i, 0)),
            scratch_shapes=[pltpu.VMEM((tm, H), jnp.float32)],
        ),
        compiler_params=pltpu.CompilerParams(
            dimension_semantics=("parallel", "arbitrary"),
            vmem_limit_bytes=vmem_limit,
        ),
        cost_estimate=cost,
    )(x2, params["w1"], params["b1"], params["w2"], params["b2"])

    return out[:M].reshape(B, S, H)


def feed_forward(x, w1, b1, w2, b2, *, compute_dtype=None, precision=None):
    """Convenience wrapper. For production, call prepare_ffn_params() once and
    reuse (hoists weight cast/pad out of the hot path)."""
    if compute_dtype is None:
        # bf16 MXU operands (f32 accumulation) by default when x is f32:
        # ~3-8x MXU throughput and half the weight HBM traffic on v6e/v7x.
        compute_dtype = jnp.bfloat16 if jnp.dtype(x.dtype) == jnp.float32 else x.dtype
    params = prepare_ffn_params(w1, b1, w2, b2, compute_dtype=compute_dtype)
    return feed_forward_prepared(x, params, precision=precision)


def reference(x, w1, b1, w2, b2):
    h = x @ w1 + b1
    h = _gelu_erf(h)
    return h @ w2 + b2


if __name__ == "__main__":
    # Small shapes implied by the module: hidden_size=32, inner_size=64.
    B, S, H, I = 2, 8, 32, 64

    key = jax.random.PRNGKey(0)
    kx, k1, k2, k3, k4 = jax.random.split(key, 5)

    x = jax.random.normal(kx, (B, S, H), dtype=jnp.float32)

    # Deterministic parameter init (PyTorch-Linear-like uniform bounds).
    bound1 = 1.0 / math.sqrt(H)
    w1 = jax.random.uniform(k1, (H, I), jnp.float32, -bound1, bound1)   # [in, out]
    b1 = jax.random.uniform(k2, (I,),   jnp.float32, -bound1, bound1)
    bound2 = 1.0 / math.sqrt(I)
    w2 = jax.random.uniform(k3, (I, H), jnp.float32, -bound2, bound2)   # [in, out]
    b2 = jax.random.uniform(k4, (H,),   jnp.float32, -bound2, bound2)

    ref = reference(x, w1, b1, w2, b2)

    # f32 MXU path with pre-hoisted params: matches the PyTorch module (eval mode).
    # (Pass precision=jax.lax.Precision.HIGHEST for bit-tight f32 parity at an MXU-pass cost.)
    params_f32 = prepare_ffn_params(w1, b1, w2, b2, compute_dtype=jnp.float32)
    out = jax.block_until_ready(feed_forward_prepared(x, params_f32))
    assert out.shape == (B, S, H)
    assert jnp.allclose(out, ref, atol=1e-5, rtol=1e-5)

    # Default path: bf16 MXU operands, f32 accumulation (looser tolerance).
    out_bf16 = jax.block_until_ready(feed_forward(x, w1, b1, w2, b2))
    assert out_bf16.shape == (B, S, H)
    assert jnp.allclose(out_bf16, ref, atol=5e-2, rtol=5e-2)

    print("KERNEL_OK")
</pallas_src>

<mosaic_0001>
module attributes {stable_mosaic.version = 11 : i64} {
  func.func @ffn_kernel(%arg0: i32, %arg1: i32, %arg2: memref<8x32xf32, #tpu.memory_space<vmem>>, %arg3: memref<32x64xf32, #tpu.memory_space<vmem>>, %arg4: memref<1x64xf32, #tpu.memory_space<vmem>>, %arg5: memref<64x32xf32, #tpu.memory_space<vmem>>, %arg6: memref<1x32xf32, #tpu.memory_space<vmem>>, %arg7: memref<8x32xf32, #tpu.memory_space<vmem>>, %arg8: memref<8x32xf32, #tpu.memory_space<vmem>>) attributes {dimension_semantics = [#tpu.dimension_semantics<parallel>, #tpu.dimension_semantics<arbitrary>], iteration_bounds = array<i64: 2, 1>, scalar_prefetch = 0 : i64, scratch_operands = 1 : i64, tpu.core_type = #tpu.core_type<tc>, window_params = [{transform_indices = @transform_0, window_bounds = array<i64: 8, 32>}, {transform_indices = @transform_1, window_bounds = array<i64: 32, 64>}, {transform_indices = @transform_2, window_bounds = array<i64: 1, 64>}, {transform_indices = @transform_3, window_bounds = array<i64: 64, 32>}, {pipeline_mode = #tpu.pipeline_mode<synchronous>, transform_indices = @transform_4, window_bounds = array<i64: 1, 32>}, {transform_indices = @transform_5, window_bounds = array<i64: 8, 32>}]} {
    %c0_i32 = arith.constant 0 : i32
    %0 = arith.cmpi eq, %arg1, %c0_i32 : i32
    %1 = arith.extui %0 : i1 to i32
    %c0_i32_0 = arith.constant 0 : i32
    %2 = arith.cmpi ne, %1, %c0_i32_0 : i32
    scf.if %2 {
      %cst_18 = arith.constant 0.000000e+00 : f32
      %25 = vector.broadcast %cst_18 : f32 to vector<8x32xf32>
      %c0_19 = arith.constant 0 : index
      %c0_20 = arith.constant 0 : index
      %26 = vector.load %arg8[%c0_19, %c0_20] : memref<8x32xf32, #tpu.memory_space<vmem>>, vector<8x32xf32>
      tpu.vector_store %arg8[%c0_19, %c0_20], %25 {strides = array<i32>} : memref<8x32xf32, #tpu.memory_space<vmem>>, vector<8x32xf32>,
    } else {
    }
    %c0 = arith.constant 0 : index
    %c0_1 = arith.constant 0 : index
    %3 = vector.load %arg2[%c0, %c0_1] : memref<8x32xf32, #tpu.memory_space<vmem>>, vector<8x32xf32>
    %c0_2 = arith.constant 0 : index
    %c0_3 = arith.constant 0 : index
    %4 = vector.load %arg3[%c0_2, %c0_3] : memref<32x64xf32, #tpu.memory_space<vmem>>, vector<32x64xf32>
    %cst = arith.constant dense<0.000000e+00> : vector<8x64xf32>
    %5 = tpu.matmul %3, %4, %cst {dimension_numbers = #tpu.dot_dimension_numbers<[1], [0], [0], [1], [0, 0, 1, 1], [], []>} : vector<8x32xf32>, vector<32x64xf32>, vector<8x64xf32> -> vector<8x64xf32>
    %c0_4 = arith.constant 0 : index
    %c0_5 = arith.constant 0 : index
    %6 = vector.load %arg4[%c0_4, %c0_5] : memref<1x64xf32, #tpu.memory_space<vmem>>, vector<1x64xf32>
    %7 = vector.broadcast %6 : vector<1x64xf32> to vector<8x64xf32>
    %8 = arith.addf %5, %7 : vector<8x64xf32>
    %cst_6 = arith.constant 5.000000e-01 : f32
    %9 = vector.broadcast %cst_6 : f32 to vector<8x64xf32>
    %10 = arith.mulf %8, %9 : vector<8x64xf32>
    %cst_7 = arith.constant 1.41421354 : f32
    %11 = vector.broadcast %cst_7 : f32 to vector<8x64xf32>
    %12 = arith.divf %8, %11 : vector<8x64xf32>
    %13 = math.erf %12 : vector<8x64xf32>
    %cst_8 = arith.constant 1.000000e+00 : f32
    %14 = vector.broadcast %cst_8 : f32 to vector<8x64xf32>
    %15 = arith.addf %14, %13 : vector<8x64xf32>
    %16 = arith.mulf %10, %15 : vector<8x64xf32>
    %c0_9 = arith.constant 0 : index
    %c0_10 = arith.constant 0 : index
    %17 = vector.load %arg8[%c0_9, %c0_10] : memref<8x32xf32, #tpu.memory_space<vmem>>, vector<8x32xf32>
    %c0_11 = arith.constant 0 : index
    %c0_12 = arith.constant 0 : index
    %18 = vector.load %arg5[%c0_11, %c0_12] : memref<64x32xf32, #tpu.memory_space<vmem>>, vector<64x32xf32>
    %cst_13 = arith.constant dense<0.000000e+00> : vector<8x32xf32>
    %19 = tpu.matmul %16, %18, %cst_13 {dimension_numbers = #tpu.dot_dimension_numbers<[1], [0], [0], [1], [0, 0, 1, 1], [], []>} : vector<8x64xf32>, vector<64x32xf32>, vector<8x32xf32> -> vector<8x32xf32>
    %20 = arith.addf %17, %19 : vector<8x32xf32>
    %c0_14 = arith.constant 0 : index
    %c0_15 = arith.constant 0 : index
    %21 = vector.load %arg8[%c0_14, %c0_15] : memref<8x32xf32, #tpu.memory_space<vmem>>, vector<8x32xf32>
    tpu.vector_store %arg8[%c0_14, %c0_15], %20 {strides = array<i32>} : memref<8x32xf32, #tpu.memory_space<vmem>>, vector<8x32xf32>,
    %c0_i32_16 = arith.constant 0 : i32
    %22 = arith.cmpi eq, %arg1, %c0_i32_16 : i32
    %23 = arith.extui %22 : i1 to i32
    %c0_i32_17 = arith.constant 0 : i32
    %24 = arith.cmpi ne, %23, %c0_i32_17 : i32
    scf.if %24 {
      %c0_18 = arith.constant 0 : index
      %c0_19 = arith.constant 0 : index
      %25 = vector.load %arg8[%c0_18, %c0_19] : memref<8x32xf32, #tpu.memory_space<vmem>>, vector<8x32xf32>
      %c0_20 = arith.constant 0 : index
      %c0_21 = arith.constant 0 : index
      %26 = vector.load %arg6[%c0_20, %c0_21] : memref<1x32xf32, #tpu.memory_space<vmem>>, vector<1x32xf32>
      %27 = vector.broadcast %26 : vector<1x32xf32> to vector<8x32xf32>
      %28 = arith.addf %25, %27 : vector<8x32xf32>
      %c0_22 = arith.constant 0 : index
      %c0_23 = arith.constant 0 : index
      %29 = vector.load %arg7[%c0_22, %c0_23] : memref<8x32xf32, #tpu.memory_space<vmem>>, vector<8x32xf32>
      tpu.vector_store %arg7[%c0_22, %c0_23], %28 {strides = array<i32>} : memref<8x32xf32, #tpu.memory_space<vmem>>, vector<8x32xf32>,
    } else {
    }
    return
  }
  func.func @transform_0(%arg0: i32, %arg1: i32) -> (i32, i32) {
    %c0_i32 = arith.constant 0 : i32
    %c0_i32_0 = arith.constant 0 : i32
    return %arg0, %c0_i32 : i32, i32
  }
  func.func @transform_1(%arg0: i32, %arg1: i32) -> (i32, i32) {
    %c0_i32 = arith.constant 0 : i32
    %c0_i32_0 = arith.constant 0 : i32
    return %c0_i32, %arg1 : i32, i32
  }
  func.func @transform_2(%arg0: i32, %arg1: i32) -> (i32, i32) {
    %c0_i32 = arith.constant 0 : i32
    %c0_i32_0 = arith.constant 0 : i32
    return %c0_i32, %arg1 : i32, i32
  }
  func.func @transform_3(%arg0: i32, %arg1: i32) -> (i32, i32) {
    %c0_i32 = arith.constant 0 : i32
    %c0_i32_0 = arith.constant 0 : i32
    return %arg1, %c0_i32 : i32, i32
  }
  func.func @transform_4(%arg0: i32, %arg1: i32) -> (i32, i32) {
    %c0_i32 = arith.constant 0 : i32
    %c0_i32_0 = arith.constant 0 : i32
    %c0_i32_1 = arith.constant 0 : i32
    return %c0_i32, %c0_i32_0 : i32, i32
  }
  func.func @transform_5(%arg0: i32, %arg1: i32) -> (i32, i32) {
    %c0_i32 = arith.constant 0 : i32
    %c0_i32_0 = arith.constant 0 : i32
    return %arg0, %c0_i32 : i32, i32
  }
}

</mosaic_0001>

<llo_original>
// kernel: tpu_custom_call.1
$region0: #{tpu_custom_call.1}
  #allocation0 [shape = 'u32[]', space=smem, size = 0x4, offset = 0x4, fixed_abs, tag = 'smem constant byte address 0x4 - core index']
  #allocation1 [shape = 'u32[144,128]{1,0:T(1,128)}', space=vmem, size = 0x12000, scoped, tag = 'internal scratch']
  #allocation2 [shape = 'f32[8,32]{1,0:T(8,128)}', space=vmem, size = 0x1000, scoped, tag = 'scratch operand']
  %s0 = inlined_call_operand.vmem [shape: f32[16,32], index: 0, kind: input, shape index: {}]
  %s1 = inlined_call_operand.vmem [shape: f32[32,64], index: 1, kind: input, shape index: {}]
  %s2 = inlined_call_operand.vmem [shape: f32[1,64], index: 2, kind: input, shape index: {}]
  %s3 = inlined_call_operand.vmem [shape: f32[64,32], index: 3, kind: input, shape index: {}]
  %s4 = inlined_call_operand.vmem [shape: f32[1,32], index: 4, kind: input, shape index: {}]
  %s5 = inlined_call_operand.hbm [shape: f32[16,32], index: 5, kind: output, shape index: {}]
  %s6 = sld [smem:[#allocation0]]
  $region61: #{tpu_custom_call.1} parent=0
    _
  %s8 = ssub.s32 1, %s6
  %s9 = scalar_select 0, %s8, %s6
  $region1: #{tpu_custom_call.1} parent=0
    #allocation3 [shape = 'u8[8192]{0}', space=vmem, size = 0x2000, scoped, tag = 'output window, operand 0']
    #allocation4 [shape = 's32[2]{0}', space=sflag, size = 0x8, scoped, tag = 'scoped memory for tpu_custom_call.1']
    %10 = vsyncpa [#allocation4], 0
    %s11 = scalar_lea.sflag [#allocation4], 1
    %12 = vsyncpa %s11, 0
    loop: start=0, step=1, limit=4
    $region2: #{tpu_custom_call.1} parent=1 // loop_pre_header
      _
    $region3: #{tpu_custom_call.1} parent=1 // loop_header
      %s14 = sphi 0, %s18
      %p15 = scmp.ge.s32.totalorder %s14, 4
      %s21 = sphi 0, %s33
      %s22 = sphi 0, %s29
      %s23 = sphi 0, %s21
      %s24 = sphi 0, %s22
      %s25 = sphi 0, %s23
      %s26 = sphi 0, %s24
      %s36 = sphi 0, %s38
      %s39 = sphi 0, %s36
      %s40 = sphi 0, %s39
      %s56 = sphi 0, %s40
      %s62 = sphi 0, %s64
      %s65 = sphi 0, %s62
      %s66 = sphi 0, %s65
      %s82 = sphi 0, %s66
      %s88 = sphi 0, %s90
      %s91 = sphi 0, %s88
      %s92 = sphi 0, %s91
      %s108 = sphi 0, %s92
      %s114 = sphi 0, %s116
      %s117 = sphi 0, %s114
      %s118 = sphi 0, %s117
      %s134 = sphi 0, %s118
      %s138 = sphi 0, %s138
      %s140 = sphi 0, %s138
      %s141 = sphi 0, %s140
      %s155 = sphi 0, %s141
      %s161 = sphi 0, %s163
      %s164 = sphi 0, %s161
      %s165 = sphi 0, %s164
      %s181 = sphi 0, %s165
    $region4: #{tpu_custom_call.1} parent=1 // loop_header_branch
      %17 = sbr.rel (%p15) target = $region8
    $region5: #{tpu_custom_call.1} parent=1 // loop_body
      %s19 = ssub.s32 %s14, 1
      %s20 = ssub.s32 %s14, 2
      %s27 = sadd.s32 1, %s22
      %p28 = scmp.ge.s32.totalorder %s27, 1
      %s29 = scalar_select %p28, 0, %s27
      %s30 = sadd.s32 1, %s21
      %s31 = scalar_select %p28, %s30, %s21
      %p32 = scmp.ge.s32.totalorder %s31, 2
      %s33 = scalar_select %p32, 0, %s31
      %s34 = ssub.s32 %s21, %s33
      %p35 = scmp.eq.s32.totalorder %s34, 0
      %s37 = sadd.s32 %s36, 1
      %s38 = scalar_select %p35, %s36, %s37
      %p41 = pneg %p35
      %p42 = scmp.eq.s32.totalorder %s14, 1
      %p43 = por %p41, %p42
      %p44 = scmp.ne.s32.totalorder %s36, %s39
      %p45 = scmp.eq.s32.totalorder %s14, 0
      %p46 = por %p44, %p45
      %p47 = scmp.ne.s32.totalorder %s36, %s39
      %p48 = scmp.eq.s32.totalorder %s19, 1
      %p49 = por %p47, %p48
      %p50 = scmp.ne.s32.totalorder %s39, %s40
      %p51 = scmp.eq.s32.totalorder %s19, 0
      %p52 = por %p50, %p51
      %p53 = scmp.ne.s32.totalorder %s39, %s40
      %p54 = scmp.eq.s32.totalorder %s20, 1
      %p55 = por %p53, %p54
      %p57 = scmp.ne.s32.totalorder %s40, %s56
      %p58 = scmp.eq.s32.totalorder %s20, 0
      %p59 = por %p57, %p58
      %s60 = ssub.s32 %s22, %s29
      %p61 = scmp.eq.s32.totalorder %s60, 0
      %s63 = sadd.s32 %s62, 1
      %s64 = scalar_select %p61, %s62, %s63
      %p67 = pneg %p61
      %p68 = scmp.eq.s32.totalorder %s14, 1
      %p69 = por %p67, %p68
      %p70 = scmp.ne.s32.totalorder %s62, %s65
      %p71 = scmp.eq.s32.totalorder %s14, 0
      %p72 = por %p70, %p71
      %p73 = scmp.ne.s32.totalorder %s62, %s65
      %p74 = scmp.eq.s32.totalorder %s19, 1
      %p75 = por %p73, %p74
      %p76 = scmp.ne.s32.totalorder %s65, %s66
      %p77 = scmp.eq.s32.totalorder %s19, 0
      %p78 = por %p76, %p77
      %p79 = scmp.ne.s32.totalorder %s65, %s66
      %p80 = scmp.eq.s32.totalorder %s20, 1
      %p81 = por %p79, %p80
      %p83 = scmp.ne.s32.totalorder %s66, %s82
      %p84 = scmp.eq.s32.totalorder %s20, 0
      %p85 = por %p83, %p84
      %s86 = ssub.s32 %s22, %s29
      %p87 = scmp.eq.s32.totalorder %s86, 0
      %s89 = sadd.s32 %s88, 1
      %s90 = scalar_select %p87, %s88, %s89
      %p93 = pneg %p87
      %p94 = scmp.eq.s32.totalorder %s14, 1
      %p95 = por %p93, %p94
      %p96 = scmp.ne.s32.totalorder %s88, %s91
      %p97 = scmp.eq.s32.totalorder %s14, 0
      %p98 = por %p96, %p97
      %p99 = scmp.ne.s32.totalorder %s88, %s91
      %p100 = scmp.eq.s32.totalorder %s19, 1
      %p101 = por %p99, %p100
      %p102 = scmp.ne.s32.totalorder %s91, %s92
      %p103 = scmp.eq.s32.totalorder %s19, 0
      %p104 = por %p102, %p103
      %p105 = scmp.ne.s32.totalorder %s91, %s92
      %p106 = scmp.eq.s32.totalorder %s20, 1
      %p107 = por %p105, %p106
      %p109 = scmp.ne.s32.totalorder %s92, %s108
      %p110 = scmp.eq.s32.totalorder %s20, 0
      %p111 = por %p109, %p110
      %s112 = ssub.s32 %s22, %s29
      %p113 = scmp.eq.s32.totalorder %s112, 0
      %s115 = sadd.s32 %s114, 1
      %s116 = scalar_select %p113, %s114, %s115
      %p119 = pneg %p113
      %p120 = scmp.eq.s32.totalorder %s14, 1
      %p121 = por %p119, %p120
      %p122 = scmp.ne.s32.totalorder %s114, %s117
      %p123 = scmp.eq.s32.totalorder %s14, 0
      %p124 = por %p122, %p123
      %p125 = scmp.ne.s32.totalorder %s114, %s117
      %p126 = scmp.eq.s32.totalorder %s19, 1
      %p127 = por %p125, %p126
      %p128 = scmp.ne.s32.totalorder %s117, %s118
      %p129 = scmp.eq.s32.totalorder %s19, 0
      %p130 = por %p128, %p129
      %p131 = scmp.ne.s32.totalorder %s117, %s118
      %p132 = scmp.eq.s32.totalorder %s20, 1
      %p133 = por %p131, %p132
      %p135 = scmp.ne.s32.totalorder %s118, %s134
      %p136 = scmp.eq.s32.totalorder %s20, 0
      %p137 = por %p135, %p136
      %s139 = sadd.s32 %s138, 1
      %p142 = scmp.eq.s32.totalorder %s14, 1
      %p143 = scmp.ne.s32.totalorder %s138, %s140
      %p144 = scmp.eq.s32.totalorder %s14, 0
      %p145 = por %p143, %p144
      %p146 = scmp.ne.s32.totalorder %s138, %s140
      %p147 = scmp.eq.s32.totalorder %s19, 1
      %p148 = por %p146, %p147
      %p149 = scmp.ne.s32.totalorder %s140, %s141
      %p150 = scmp.eq.s32.totalorder %s19, 0
      %p151 = por %p149, %p150
      %p152 = scmp.ne.s32.totalorder %s140, %s141
      %p153 = scmp.eq.s32.totalorder %s20, 1
      %p154 = por %p152, %p153
      %p156 = scmp.ne.s32.totalorder %s141, %s155
      %p157 = scmp.eq.s32.totalorder %s20, 0
      %p158 = por %p156, %p157
      %s159 = ssub.s32 %s21, %s33
      %p160 = scmp.eq.s32.totalorder %s159, 0
      %s162 = sadd.s32 %s161, 1
      %s163 = scalar_select %p160, %s161, %s162
      %p166 = pneg %p160
      %p167 = scmp.eq.s32.totalorder %s14, 1
      %p168 = por %p166, %p167
      %p169 = scmp.ne.s32.totalorder %s161, %s164
      %p170 = scmp.eq.s32.totalorder %s14, 0
      %p171 = por %p169, %p170
      %p172 = scmp.ne.s32.totalorder %s161, %s164
      %p173 = scmp.eq.s32.totalorder %s19, 1
      %p174 = por %p172, %p173
      %p175 = scmp.ne.s32.totalorder %s164, %s165
      %p176 = scmp.eq.s32.totalorder %s19, 0
      %p177 = por %p175, %p176
      %p178 = scmp.ne.s32.totalorder %s164, %s165
      %p179 = scmp.eq.s32.totalorder %s20, 1
      %p180 = por %p178, %p179
      %p182 = scmp.ne.s32.totalorder %s165, %s181
      %p183 = scmp.eq.s32.totalorder %s20, 0
      %p184 = por %p182, %p183
      %p185 = scmp.le.s32.totalorder 1, %s14
      %p186 = scmp.lt.s32.totalorder %s14, 3
      %p187 = pnand %p185, %p186
      %p188 = pneg %p187
      // Predicated region
      $region9: #{tpu_custom_call.1} parent=5 // pred_check
        _
      $region10: #{tpu_custom_call.1} parent=5 // pred_check_branch
        %190 = sbr.rel (%p187) target = $region12
      $region11: #{tpu_custom_call.1} parent=5 // pred_region
        %s191 = ssub.s32 %s14, 1
        // Predicated region
        $region13: #{tpu_custom_call.1} parent=11 // pred_check
          %p192 = pneg %p78
        $region14: #{tpu_custom_call.1} parent=11 // pred_check_branch
          %194 = sbr.rel (%p192) target = $region16
        $region15: #{tpu_custom_call.1} parent=11 // pred_region
          %p195 = scmp.lt.s32.totalorder %s24, 0
          %s196 = scalar_select %p195, %s24, 0
          %s197 = smul.addr %s196, 8
          %s198 = scalar_lea.vmem %s1, %s197
        $region16: #{tpu_custom_call.1} parent=11 // pred_fallthru
          _
        // Predicated region
        $region17: #{tpu_custom_call.1} parent=11 // pred_check
          %p199 = pneg %p104
        $region18: #{tpu_custom_call.1} parent=11 // pred_check_branch
          %201 = sbr.rel (%p199) target = $region20
        $region19: #{tpu_custom_call.1} parent=11 // pred_region
          %p202 = scmp.lt.s32.totalorder %s24, 0
          %s203 = scalar_select %p202, %s24, 0
          %s204 = scalar_lea.vmem %s2, %s203
        $region20: #{tpu_custom_call.1} parent=11 // pred_fallthru
          _
        // Predicated region
        $region21: #{tpu_custom_call.1} parent=11 // pred_check
          %p205 = pneg %p130
        $region22: #{tpu_custom_call.1} parent=11 // pred_check_branch
          %207 = sbr.rel (%p205) target = $region24
        $region23: #{tpu_custom_call.1} parent=11 // pred_region
          %s208 = smul.u32 8, %s24
          %p209 = scmp.lt.s32.totalorder %s208, 7
          %s210 = scalar_select %p209, %s208, 7
          %s211 = smul.addr %s210, 8
          %s212 = scalar_lea.vmem %s3, %s211
          %s213 = smul.u32 8, %s24
        $region24: #{tpu_custom_call.1} parent=11 // pred_fallthru
          _
        // Predicated region
        $region25: #{tpu_custom_call.1} parent=11 // pred_check
          %p214 = pneg %p151
        $region26: #{tpu_custom_call.1} parent=11 // pred_check_branch
          %216 = sbr.rel (%p214) target = $region28
        $region27: #{tpu_custom_call.1} parent=11 // pred_region
          _
        $region28: #{tpu_custom_call.1} parent=11 // pred_fallthru
          _
      $region12: #{tpu_custom_call.1} parent=5 // pred_fallthru
        _
      %p217 = scmp.lt.s32.totalorder %s14, 2
      // Predicated region
      $region29: #{tpu_custom_call.1} parent=5 // pred_check
        %p218 = pneg %p217
      $region30: #{tpu_custom_call.1} parent=5 // pred_check_branch
        %220 = sbr.rel (%p218) target = $region32
      $region31: #{tpu_custom_call.1} parent=5 // pred_region
        // Predicated region
        $region33: #{tpu_custom_call.1} parent=31 // pred_check
          %p221 = pneg %p46
        $region34: #{tpu_custom_call.1} parent=31 // pred_check_branch
          %223 = sbr.rel (%p221) target = $region36
        $region35: #{tpu_custom_call.1} parent=31 // pred_region
          %p224 = scmp.lt.s32.totalorder %s21, 1
          %s225 = scalar_select %p224, %s21, 1
          %s226 = smul.addr %s225, 8
          %s227 = scalar_lea.vmem %s0, %s226
        $region36: #{tpu_custom_call.1} parent=31 // pred_fallthru
          _
      $region32: #{tpu_custom_call.1} parent=5 // pred_fallthru
        _
      %p228 = scmp.le.s32.totalorder 1, %s14
      %p229 = scmp.lt.s32.totalorder %s14, 3
      %p230 = pnand %p228, %p229
      %p231 = pneg %p230
      // Predicated region
      $region37: #{tpu_custom_call.1} parent=5 // pred_check
        _
      $region38: #{tpu_custom_call.1} parent=5 // pred_check_branch
        %233 = sbr.rel (%p230) target = $region40
      $region39: #{tpu_custom_call.1} parent=5 // pred_region
        %s234 = ssub.s32 %s14, 1
        %p235 = scmp.lt.s32.totalorder %s23, 1
        %s236 = scalar_select %p235, %s23, 1
        %s237 = smul.addr %s236, 8
        %s238 = scalar_lea.vmem %s0, %s237
        %p239 = pneg %p52
        %p240 = pneg %p49
        %p241 = scmp.lt.s32.totalorder %s24, 0
        %s242 = scalar_select %p241, %s24, 0
        %s243 = smul.addr %s242, 8
        %s244 = scalar_lea.vmem %s1, %s243
        %p245 = pneg %p78
        %p246 = pneg %p75
        %p247 = scmp.lt.s32.totalorder %s24, 0
        %s248 = scalar_select %p247, %s24, 0
        %s249 = scalar_lea.vmem %s2, %s248
        %p250 = pneg %p104
        %p251 = pneg %p101
        %s252 = smul.u32 8, %s24
        %p253 = scmp.lt.s32.totalorder %s252, 7
        %s254 = scalar_select %p253, %s252, 7
        %s255 = smul.addr %s254, 8
        %s256 = scalar_lea.vmem %s3, %s255
        %p257 = pneg %p130
        %p258 = pneg %p127
        %p259 = pneg %p151
        %p260 = pneg %p148
        %p261 = pneg %p177
        %p262 = pneg %p174
        %s263 = sand.u32 %s164, 1
        %s264 = scalar_lea.sflag [#allocation4], %s263
        %s265 = sand.u32 %s164, 1
        %s266 = smul.addr %s265, 8
        %s267 = scalar_lea.vmem [#allocation3], %s266
        %p268 = scmp.lt.s32.totalorder %s23, 1
        %s269 = scalar_select %p268, %s23, 1
        %s270 = smul.addr %s269, 8
        %s271 = scalar_lea.vmem %s0, %s270
        %p272 = scmp.lt.s32.totalorder %s24, 0
        %s273 = scalar_select %p272, %s24, 0
        %s274 = smul.addr %s273, 8
        %s275 = scalar_lea.vmem %s1, %s274
        %p276 = scmp.lt.s32.totalorder %s24, 0
        %s277 = scalar_select %p276, %s24, 0
        %s278 = scalar_lea.vmem %s2, %s277
        %s279 = smul.u32 8, %s24
        %p280 = scmp.lt.s32.totalorder %s279, 7
        %s281 = scalar_select %p280, %s279, 7
        %s282 = smul.addr %s281, 8
        %s283 = scalar_lea.vmem %s3, %s282
        %s284 = smul.u32 8, %s24
        %p285 = scmp.eq.s32.totalorder %s24, 0
        // Predicated region
        $region41: #{tpu_custom_call.1} parent=39 // pred_check
          %p286 = pneg %p285
        $region42: #{tpu_custom_call.1} parent=39 // pred_check_branch
          %288 = sbr.rel (%p286) target = $region44
        $region43: #{tpu_custom_call.1} parent=39 // pred_region
          %vm289 = vcmask 261120
          %290 = vst.msk [vmem:[#allocation2] sm:$0xff] %vm289, 0.0
        $region44: #{tpu_custom_call.1} parent=39 // pred_fallthru
          _
        %v291 = vld [vmem:[%s271] sm:$0xff]
        %v292 = vld [vmem:[%s275] sm:$0xff]
        %v293 = vld [vmem:[%s275 + $0x8] sm:$0xff]
        %v294 = vld [vmem:[%s275 + $0x10] sm:$0xff]
        %v295 = vld [vmem:[%s275 + $0x18] sm:$0xff]
        %v296 = vld [vmem:[%s278] sm:$0x1]
        %v298 = vlaneseq
        %v299 = vshrl.u32 %v298, 7
        %v300 = vsub.s32 0, %v299
        %v301 = vrot.slane %v296, %v300
        %vm303 = vcmask 261120
        %v305 = vsel %vm303, %v291, 0
        %307 = vmatprep.subr.mxu0 0.0
        %308 = vmatpush1.msra.mxu0 0.0
        %309 = vmatprep.subr.mxu0 0.0
        %310 = vmatpush1.msra.mxu0 0.0
        %311 = vmatprep.subr.mxu0 0.0
        %312 = vmatpush1.msra.mxu0 0.0
        %313 = vmatprep.subr.mxu0 0.0
        %314 = vmatpush1.msra.mxu0 0.0
        %315 = vmatprep.subr.mxu0 0.0
        %316 = vmatpush1.msra.mxu0 0.0
        %317 = vmatprep.subr.mxu0 0.0
        %318 = vmatpush1.msra.mxu0 0.0
        %319 = vmatprep.subr.mxu0 0.0
        %320 = vmatpush1.msra.mxu0 0.0
        %321 = vmatprep.subr.mxu0 0.0
        %322 = vmatpush1.msra.mxu0 0.0
        %323 = vmatprep.subr.mxu0 0.0
        %324 = vmatpush1.msra.mxu0 0.0
        %325 = vmatprep.subr.mxu0 0.0
        %326 = vmatpush1.msra.mxu0 0.0
        %327 = vmatprep.subr.mxu0 0.0
        %328 = vmatpush1.msra.mxu0 0.0
        %329 = vmatprep.subr.mxu0 0.0
        %330 = vmatpush1.msra.mxu0 0.0
        %331 = vmatprep.subr.mxu0 0.0
        %332 = vmatpush1.msra.mxu0 %v295
        %333 = vmatprep.subr.mxu0 0.0
        %334 = vmatpush1.msra.mxu0 %v294
        %335 = vmatprep.subr.mxu0 0.0
        %336 = vmatpush1.msra.mxu0 %v293
        %337 = vmatprep.subr.mxu0 0.0
        %338 = vmatpush1.msra.mxu0 %v292
        %339 = vmatprep.subr.mxu0 0.0
        %340 = vmatpush2.msra.mxu0 0.0
        %341 = vmatprep.subr.mxu0 0.0
        %342 = vmatpush2.msra.mxu0 0.0
        %343 = vmatprep.subr.mxu0 0.0
        %344 = vmatpush2.msra.mxu0 0.0
        %345 = vmatprep.subr.mxu0 0.0
        %346 = vmatpush2.msra.mxu0 0.0
        %347 = vmatprep.subr.mxu0 0.0
        %348 = vmatpush2.msra.mxu0 0.0
        %349 = vmatprep.subr.mxu0 0.0
        %350 = vmatpush2.msra.mxu0 0.0
        %351 = vmatprep.subr.mxu0 0.0
        %352 = vmatpush2.msra.mxu0 0.0
        %353 = vmatprep.subr.mxu0 0.0
        %354 = vmatpush2.msra.mxu0 0.0
        %355 = vmatprep.subr.mxu0 0.0
        %356 = vmatpush2.msra.mxu0 0.0
        %357 = vmatprep.subr.mxu0 0.0
        %358 = vmatpush2.msra.mxu0 0.0
        %359 = vmatprep.subr.mxu0 0.0
        %360 = vmatpush2.msra.mxu0 0.0
        %361 = vmatprep.subr.mxu0 0.0
        %362 = vmatpush2.msra.mxu0 0.0
        %363 = vmatprep.subr.mxu0 0.0
        %364 = vmatpush2.msra.mxu0 0.0
        %365 = vmatprep.subr.mxu0 0.0
        %366 = vmatpush2.msra.mxu0 0.0
        %367 = vmatprep.subr.mxu0 0.0
        %368 = vmatpush2.msra.mxu0 0.0
        %369 = vmatprep.subr.mxu0 0.0
        %370 = vmatpush2.msra.mxu0 0.0
        %371 = vmatprep.mubr.f32.mxu0 0.0
        %372 = vmatmul.mubr.f32.gmra.mxu0 %v305
        %v373 = vpop.f32.mrf.mxu0
        %v374 = vadd.f32 %v301, %v373
        %v375 = vpop.f32.mrf.mxu0
        %376 = vdwg.mxu0
        %v377 = vmul.f32 %v374, 0.5
        %v378 = vrcp.pop 1.4142135
        %v379 = vmul.f32 %v374, %v378
        %v380 = verf.f32.pop %v379
        %v381 = vadd.f32 %v380, 1.0
        %v382 = vmul.f32 %v377, %v381
        %v383 = vld [vmem:[#allocation2] sm:$0xff]
        %v384 = vld [vmem:[%s283] sm:$0xff]
        %v385 = vld [vmem:[%s283 + $0x8] sm:$0xff]
        %v386 = vld [vmem:[%s283 + $0x10] sm:$0xff]
        %v387 = vld [vmem:[%s283 + $0x18] sm:$0xff]
        %v388 = vld [vmem:[%s283 + $0x20] sm:$0xff]
        %v389 = vld [vmem:[%s283 + $0x28] sm:$0xff]
        %v390 = vld [vmem:[%s283 + $0x30] sm:$0xff]
        %v391 = vld [vmem:[%s283 + $0x38] sm:$0xff]
        %vm392 = vcmask 523264
        %v394 = vsel %vm392, %v382, 0
        %396 = vmatprep.subr.mxu0 0.0
        %397 = vmatpush1.msra.mxu0 0.0
        %398 = vmatprep.subr.mxu0 0.0
        %399 = vmatpush1.msra.mxu0 0.0
        %400 = vmatprep.subr.mxu0 0.0
        %401 = vmatpush1.msra.mxu0 0.0
        %402 = vmatprep.subr.mxu0 0.0
        %403 = vmatpush1.msra.mxu0 0.0
        %404 = vmatprep.subr.mxu0 0.0
        %405 = vmatpush1.msra.mxu0 0.0
        %406 = vmatprep.subr.mxu0 0.0
        %407 = vmatpush1.msra.mxu0 0.0
        %408 = vmatprep.subr.mxu0 0.0
        %409 = vmatpush1.msra.mxu0 0.0
        %410 = vmatprep.subr.mxu0 0.0
        %411 = vmatpush1.msra.mxu0 0.0
        %412 = vmatprep.subr.mxu0 0.0
        %413 = vmatpush1.msra.mxu0 %v391
        %414 = vmatprep.subr.mxu0 0.0
        %415 = vmatpush1.msra.mxu0 %v390
        %416 = vmatprep.subr.mxu0 0.0
        %417 = vmatpush1.msra.mxu0 %v389
        %418 = vmatprep.subr.mxu0 0.0
        %419 = vmatpush1.msra.mxu0 %v388
        %420 = vmatprep.subr.mxu0 0.0
        %421 = vmatpush1.msra.mxu0 %v387
        %422 = vmatprep.subr.mxu0 0.0
        %423 = vmatpush1.msra.mxu0 %v386
        %424 = vmatprep.subr.mxu0 0.0
        %425 = vmatpush1.msra.mxu0 %v385
        %426 = vmatprep.subr.mxu0 0.0
        %427 = vmatpush1.msra.mxu0 %v384
        %428 = vmatprep.subr.mxu0 0.0
        %429 = vmatpush2.msra.mxu0 0.0
        %430 = vmatprep.subr.mxu0 0.0
        %431 = vmatpush2.msra.mxu0 0.0
        %432 = vmatprep.subr.mxu0 0.0
        %433 = vmatpush2.msra.mxu0 0.0
        %434 = vmatprep.subr.mxu0 0.0
        %435 = vmatpush2.msra.mxu0 0.0
        %436 = vmatprep.subr.mxu0 0.0
        %437 = vmatpush2.msra.mxu0 0.0
        %438 = vmatprep.subr.mxu0 0.0
        %439 = vmatpush2.msra.mxu0 0.0
        %440 = vmatprep.subr.mxu0 0.0
        %441 = vmatpush2.msra.mxu0 0.0
        %442 = vmatprep.subr.mxu0 0.0
        %443 = vmatpush2.msra.mxu0 0.0
        %444 = vmatprep.subr.mxu0 0.0
        %445 = vmatpush2.msra.mxu0 0.0
        %446 = vmatprep.subr.mxu0 0.0
        %447 = vmatpush2.msra.mxu0 0.0
        %448 = vmatprep.subr.mxu0 0.0
        %449 = vmatpush2.msra.mxu0 0.0
        %450 = vmatprep.subr.mxu0 0.0
        %451 = vmatpush2.msra.mxu0 0.0
        %452 = vmatprep.subr.mxu0 0.0
        %453 = vmatpush2.msra.mxu0 0.0
        %454 = vmatprep.subr.mxu0 0.0
        %455 = vmatpush2.msra.mxu0 0.0
        %456 = vmatprep.subr.mxu0 0.0
        %457 = vmatpush2.msra.mxu0 0.0
        %458 = vmatprep.subr.mxu0 0.0
        %459 = vmatpush2.msra.mxu0 0.0
        %460 = vmatprep.mubr.f32.mxu0 0.0
        %461 = vmatmul.mubr.f32.gmra.mxu0 %v394
        %v462 = vpop.f32.mrf.mxu0
        %v463 = vadd.f32 0.0, %v462
        %v464 = vpop.f32.mrf.mxu0
        %465 = vdwg.mxu0
        %v466 = vadd.f32 %v383, %v463
        %467 = vst.msk [vmem:[#allocation2] sm:$0xff] %vm303, %v466
        // Predicated region
        $region45: #{tpu_custom_call.1} parent=39 // pred_check
          %p468 = pneg %p285
        $region46: #{tpu_custom_call.1} parent=39 // pred_check_branch
          %470 = sbr.rel (%p468) target = $region48
        $region47: #{tpu_custom_call.1} parent=39 // pred_region
          %v471 = vld [vmem:[#allocation2] sm:$0xff]
          %v472 = vld [vmem:[%s4] sm:$0x1]
          %v474 = vlaneseq
          %v475 = vshrl.u32 %v474, 7
          %v476 = vsub.s32 0, %v475
          %v477 = vrot.slane %v472, %v476
          %v479 = vadd.f32 %v471, %v477
          %480 = vst.msk [vmem:[%s267] sm:$0xff] %vm303, %v479
        $region48: #{tpu_custom_call.1} parent=39 // pred_fallthru
          _
        %s481 = sand.u32 %s164, 1
        %s482 = scalar_lea.sflag [#allocation4], %s481
        %s483 = sand.u32 %s164, 1
        %s484 = smul.addr %s483, 8
        %s485 = scalar_lea.vmem [#allocation3], %s484
        // Predicated region
        $region49: #{tpu_custom_call.1} parent=39 // pred_check
          %p486 = pneg %p174
        $region50: #{tpu_custom_call.1} parent=39 // pred_check_branch
          %488 = sbr.rel (%p486) target = $region52
        $region51: #{tpu_custom_call.1} parent=39 // pred_region
          %s490 = ssub.s32 128, 128
          %491 = vsyncadd %s482, %s490
          %s492 = smul.addr %s23, 128
          %s493 = scalar_lea.hbm %s5, %s492
          %s495 = sshll.u32 %s485, 4
          %s496 = int_to_ptr.vmem [resolvable:$true] %s495
          %498 = dma.vmem_to_hbm [thread:$0]  %s496, 128, %s493, %s482
        $region52: #{tpu_custom_call.1} parent=39 // pred_fallthru
          _
      $region40: #{tpu_custom_call.1} parent=5 // pred_fallthru
        _
      %p499 = scmp.le.s32.totalorder 2, %s14
      // Predicated region
      $region53: #{tpu_custom_call.1} parent=5 // pred_check
        %p500 = pneg %p499
      $region54: #{tpu_custom_call.1} parent=5 // pred_check_branch
        %502 = sbr.rel (%p500) target = $region56
      $region55: #{tpu_custom_call.1} parent=5 // pred_region
        %s503 = ssub.s32 %s14, 2
        // Predicated region
        $region57: #{tpu_custom_call.1} parent=55 // pred_check
          %p504 = pneg %p180
        $region58: #{tpu_custom_call.1} parent=55 // pred_check_branch
          %506 = sbr.rel (%p504) target = $region60
        $region59: #{tpu_custom_call.1} parent=55 // pred_region
          %s507 = sand.u32 %s165, 1
          %s508 = scalar_lea.sflag [#allocation4], %s507
          %s509 = sand.u32 %s165, 1
          %s510 = smul.addr %s509, 8
          %s511 = scalar_lea.vmem [#allocation3], %s510
          %512 = dma.done %s508, 128
        $region60: #{tpu_custom_call.1} parent=55 // pred_fallthru
          _
      $region56: #{tpu_custom_call.1} parent=5 // pred_fallthru
        _
    $region6: #{tpu_custom_call.1} parent=1 // loop_footer
      %s18 = sadd.s32 1, %s14
    $region7: #{tpu_custom_call.1} parent=1 // loop_footer_branch
      %13 = sbr.rel target = $region3
    $region8: #{tpu_custom_call.1} parent=1 // loop_exit
      _
    %513 = vsyncpa [#allocation4], 1
    %s514 = scalar_lea.sflag [#allocation4], 1
    %515 = vsyncpa %s514, 1

</llo_original>
